<compile_context>
chip_gen: v6e
topology: v6e:2x2x1
jax: 0.10.0
libtpu: 0.0.40
codegen_flags: <defaults>
</compile_context>

<pallas_src>
import functools

import jax
import jax.numpy as jnp
from jax.experimental import pallas as pl
from jax.experimental.pallas import tpu as pltpu


# ----------------------------------------------------------------------------
# In-kernel helpers
# ----------------------------------------------------------------------------
def _gelu(x):
    # BERT-style tanh-approx GELU (custom GELU module in the original repo).
    return 0.5 * x * (1.0 + jnp.tanh(0.7978845608028654 * (x + 0.044715 * x * x * x)))


def _choose_row_tile(M, max_tile=256):
    """Biggest reasonable row tile: up to 256 rows, padded to sublane multiple."""
    if M >= max_tile:
        tile = max_tile
    else:
        tile = max(8, ((M + 7) // 8) * 8)
    Mp = -(-M // tile) * tile
    return tile, Mp


def _pad_rows(x, Mp):
    M = x.shape[0]
    return x if M == Mp else jnp.pad(x, ((0, Mp - M), (0, 0)))


# ----------------------------------------------------------------------------
# Kernel 1: fused EmbeddingEncoder (chain of Linear + GELU layers)
# ----------------------------------------------------------------------------
def _encoder_kernel(x_ref, *refs, num_layers):
    # refs = (w0, b0, w1, b1, ..., o_ref).  Weights/activations bf16 in,
    # f32 MXU accumulation, f32 elementwise math.
    o_ref = refs[-1]
    h = x_ref[...]                                      # bf16
    for l in range(num_layers):
        w = refs[2 * l][...]                            # bf16
        b = refs[2 * l + 1][...]                        # f32 (1, N)
        h = jnp.dot(h.astype(jnp.bfloat16), w,
                    preferred_element_type=jnp.float32) + b
        h = _gelu(h)                                    # f32
    o_ref[...] = h


def pallas_encoder(x3d, layers, max_tile=256):
    # TODO(synk): EmbeddingEncoder source not provided -- reconstructed as
    # `layer_num` stacked Linear+GELU layers, fused into a single kernel.
    B, L, E = x3d.shape
    x = x3d.reshape(B * L, E)
    M = x.shape[0]
    tile, Mp = _choose_row_tile(M, max_tile)
    out_dim = layers[-1]["w"].shape[1]

    args = [_pad_rows(x, Mp).astype(jnp.bfloat16)]
    in_specs = [pl.BlockSpec((tile, E), lambda i: (i, 0))]
    for layer in layers:
        w = layer["w"].astype(jnp.bfloat16)
        b = layer["b"]
        args += [w, b]
        in_specs += [pl.BlockSpec(w.shape, lambda i: (0, 0)),
                     pl.BlockSpec(b.shape, lambda i: (0, 0))]

    out = pl.pallas_call(
        functools.partial(_encoder_kernel, num_layers=len(layers)),
        out_shape=jax.ShapeDtypeStruct((Mp, out_dim), jnp.float32),
        grid=(Mp // tile,),
        in_specs=in_specs,
        out_specs=pl.BlockSpec((tile, out_dim), lambda i: (i, 0)),
        compiler_params=pltpu.CompilerParams(dimension_semantics=("parallel",)),
    )(*args)
    return out[:M].reshape(B, L, out_dim)


# ----------------------------------------------------------------------------
# Kernel 2: fused SFU + two WordsCaps projections (no HBM concat of [c;f])
# ----------------------------------------------------------------------------
def _caps_proj_kernel(c_ref, f_ref, wr_ref, br_ref, wg_ref, bg_ref,
                      wcap_ref, wcapsfu_ref, uc_ref, usfu_ref):
    c = c_ref[...]                 # (tile, H) bf16
    f = f_ref[...]                 # (tile, H) bf16
    H = c.shape[1]
    wr = wr_ref[...]               # (2H, H) bf16 -- split instead of concat(c,f)
    wg = wg_ref[...]
    # SFU: r = tanh(Wr [c;f] + br), g = sigmoid(Wg [c;f] + bg), o = g*r + (1-g)*c
    r = jnp.tanh(jnp.dot(c, wr[:H], preferred_element_type=jnp.float32)
                 + jnp.dot(f, wr[H:], preferred_element_type=jnp.float32)
                 + br_ref[...])
    g = jax.nn.sigmoid(jnp.dot(c, wg[:H], preferred_element_type=jnp.float32)
                       + jnp.dot(f, wg[H:], preferred_element_type=jnp.float32)
                       + bg_ref[...])
    sfu = g * r + (1.0 - g) * c.astype(jnp.float32)      # (tile, H) f32
    # WordsCaps u_hat projections: x @ W  -> (tile, J*H)
    uc_ref[...] = jnp.dot(c, wcap_ref[...], preferred_element_type=jnp.float32)
    usfu_ref[...] = jnp.dot(sfu.astype(jnp.bfloat16), wcapsfu_ref[...],
                            preferred_element_type=jnp.float32)


def pallas_caps_proj(c, f, sfu_p, w_cap, w_cap_sfu, max_tile=256):
    M, H = c.shape
    JH = w_cap.shape[1]
    tile, Mp = _choose_row_tile(M, max_tile)
    c_b = _pad_rows(c, Mp).astype(jnp.bfloat16)
    f_b = _pad_rows(f, Mp).astype(jnp.bfloat16)
    wr = sfu_p["r"]["w"].astype(jnp.bfloat16); br = sfu_p["r"]["b"]
    wg = sfu_p["g"]["w"].astype(jnp.bfloat16); bg = sfu_p["g"]["b"]
    wc = w_cap.astype(jnp.bfloat16)
    ws = w_cap_sfu.astype(jnp.bfloat16)

    uc, usfu = pl.pallas_call(
        _caps_proj_kernel,
        out_shape=(jax.ShapeDtypeStruct((Mp, JH), jnp.float32),
                   jax.ShapeDtypeStruct((Mp, JH), jnp.float32)),
        grid=(Mp // tile,),
        in_specs=[
            pl.BlockSpec((tile, H), lambda i: (i, 0)),
            pl.BlockSpec((tile, H), lambda i: (i, 0)),
            pl.BlockSpec(wr.shape, lambda i: (0, 0)),
            pl.BlockSpec(br.shape, lambda i: (0, 0)),
            pl.BlockSpec(wg.shape, lambda i: (0, 0)),
            pl.BlockSpec(bg.shape, lambda i: (0, 0)),
            pl.BlockSpec(wc.shape, lambda i: (0, 0)),
            pl.BlockSpec(ws.shape, lambda i: (0, 0)),
        ],
        out_specs=(pl.BlockSpec((tile, JH), lambda i: (i, 0)),
                   pl.BlockSpec((tile, JH), lambda i: (i, 0))),
        compiler_params=pltpu.CompilerParams(dimension_semantics=("parallel",)),
    )(c_b, f_b, wr, br, wg, bg, wc, ws)
    return uc[:M], usfu[:M]


# ----------------------------------------------------------------------------
# Kernel 3: capsule attention  out = gelu( softmax(q @ c_cap^T) @ sfu_cap )
# ----------------------------------------------------------------------------
def _caps_attn_kernel(q_ref, ccap_ref, scap_ref, o_ref):
    q = q_ref[0]       # (L, H)
    cc = ccap_ref[0]   # (J, H)
    sc = scap_ref[0]   # (J, H)
    att = jax.lax.dot_general(q, cc, (((1,), (1,)), ((), ())),
                              preferred_element_type=jnp.float32)   # (L, J)
    att = att - jnp.max(att, axis=-1, keepdims=True)
    e = jnp.exp(att)
    p = e / jnp.sum(e, axis=-1, keepdims=True)
    o_ref[0] = _gelu(jnp.dot(p, sc, preferred_element_type=jnp.float32))


def pallas_caps_attn(q, c_cap, sfu_cap):
    B, L, H = q.shape
    J = c_cap.shape[1]
    return pl.pallas_call(
        _caps_attn_kernel,
        out_shape=jax.ShapeDtypeStruct((B, L, H), jnp.float32),
        grid=(B,),
        in_specs=[
            pl.BlockSpec((1, L, H), lambda b: (b, 0, 0)),
            pl.BlockSpec((1, J, H), lambda b: (b, 0, 0)),
            pl.BlockSpec((1, J, H), lambda b: (b, 0, 0)),
        ],
        out_specs=pl.BlockSpec((1, L, H), lambda b: (b, 0, 0)),
        compiler_params=pltpu.CompilerParams(dimension_semantics=("parallel",)),
    )(q, c_cap, sfu_cap)


# ----------------------------------------------------------------------------
# Kernel 4: fused "block tail"
#   SelfAttnMatch (matched-only) -> gelu -> ffn -> gelu -> LayerNorm -> +residual
# ----------------------------------------------------------------------------
def _block_tail_kernel(cat_ref, ce_ref, ws_ref, bs_ref, wf_ref, bf_ref,
                       g_ref, be_ref, o_ref, *, eps):
    cat = cat_ref[0]                                               # (L, 2H) f32
    # SelfAttnMatch (canonical: relu(Wx) similarity; diagonal kept; alpha stays
    # in VMEM -- never written back to HBM).
    proj = jnp.maximum(
        jnp.dot(cat, ws_ref[...], preferred_element_type=jnp.float32) + bs_ref[...],
        0.0)
    s = jax.lax.dot_general(proj, proj, (((1,), (1,)), ((), ())),
                            preferred_element_type=jnp.float32)    # (L, L)
    s = s - jnp.max(s, axis=-1, keepdims=True)
    e = jnp.exp(s)
    alpha = e / jnp.sum(e, axis=-1, keepdims=True)
    matched = jnp.dot(alpha, cat, preferred_element_type=jnp.float32)  # (L, 2H)
    # gelu(ffn(gelu(matched)))
    h = _gelu(jnp.dot(_gelu(matched), wf_ref[...],
                      preferred_element_type=jnp.float32) + bf_ref[...])
    # ResConnectionLayer reconstructed as LayerNorm (+ identity dropout),
    # fused with the residual add.
    mu = jnp.mean(h, axis=-1, keepdims=True)
    var = jnp.mean((h - mu) ** 2, axis=-1, keepdims=True)
    ln = (h - mu) * jax.lax.rsqrt(var + eps) * g_ref[...] + be_ref[...]
    o_ref[0] = ce_ref[0] + ln


def pallas_block_tail(concat, c_enc, selfatt_p, ffn_p, resn_p, eps=1e-5):
    B, L, H2 = concat.shape
    H = c_enc.shape[2]
    return pl.pallas_call(
        functools.partial(_block_tail_kernel, eps=eps),
        out_shape=jax.ShapeDtypeStruct((B, L, H), jnp.float32),
        grid=(B,),
        in_specs=[
            pl.BlockSpec((1, L, H2), lambda b: (b, 0, 0)),
            pl.BlockSpec((1, L, H), lambda b: (b, 0, 0)),
            pl.BlockSpec(selfatt_p["w"].shape, lambda b: (0, 0)),
            pl.BlockSpec(selfatt_p["b"].shape, lambda b: (0, 0)),
            pl.BlockSpec(ffn_p["w"].shape, lambda b: (0, 0)),
            pl.BlockSpec(ffn_p["b"].shape, lambda b: (0, 0)),
            pl.BlockSpec(resn_p["gamma"].shape, lambda b: (0, 0)),
            pl.BlockSpec(resn_p["beta"].shape, lambda b: (0, 0)),
        ],
        out_specs=pl.BlockSpec((1, L, H), lambda b: (b, 0, 0)),
        compiler_params=pltpu.CompilerParams(dimension_semantics=("parallel",)),
    )(concat, c_enc, selfatt_p["w"], selfatt_p["b"], ffn_p["w"], ffn_p["b"],
      resn_p["gamma"], resn_p["beta"])


# ----------------------------------------------------------------------------
# Kernel 5: scores-only SelfAttnMatch (alpha only; matched never computed)
# ----------------------------------------------------------------------------
def _attn_scores_kernel(x_ref, w_ref, b_ref, a_ref):
    x = x_ref[0]                                                    # (L, H)
    proj = jnp.maximum(
        jnp.dot(x, w_ref[...], preferred_element_type=jnp.float32) + b_ref[...],
        0.0)
    s = jax.lax.dot_general(proj, proj, (((1,), (1,)), ((), ())),
                            preferred_element_type=jnp.float32)
    s = s - jnp.max(s, axis=-1, keepdims=True)
    e = jnp.exp(s)
    a_ref[0] = e / jnp.sum(e, axis=-1, keepdims=True)


def pallas_attn_scores(x, p):
    B, L, H = x.shape
    return pl.pallas_call(
        _attn_scores_kernel,
        out_shape=jax.ShapeDtypeStruct((B, L, L), jnp.float32),
        grid=(B,),
        in_specs=[pl.BlockSpec((1, L, H), lambda b: (b, 0, 0)),
                  pl.BlockSpec(p["w"].shape, lambda b: (0, 0)),
                  pl.BlockSpec(p["b"].shape, lambda b: (0, 0))],
        out_specs=pl.BlockSpec((1, L, L), lambda b: (b, 0, 0)),
        compiler_params=pltpu.CompilerParams(dimension_semantics=("parallel",)),
    )(x, p["w"], p["b"])


# ----------------------------------------------------------------------------
# Plain-JAX glue (embedding gathers, tiny 3-iteration dynamic routing)
# ----------------------------------------------------------------------------
def _squash(s, eps=1e-8):
    n2 = jnp.sum(s * s, axis=-1, keepdims=True)
    return (n2 / (1.0 + n2)) * s / jnp.sqrt(n2 + eps)


def dynamic_routing(u_hat, num_routing):
    # TODO(synk): WordsCapsLayer source not provided -- standard dynamic routing
    # reconstructed; the 3-iteration loop over 4 capsules stays in plain JAX
    # (the heavy u_hat projection runs in the fused Pallas kernel).
    B, L, J, D = u_hat.shape
    b = jnp.zeros((B, L, J), dtype=jnp.float32)
    v = None
    for _ in range(num_routing):
        c = jax.nn.softmax(b, axis=-1)
        s = jnp.einsum("blj,bljd->bjd", c, u_hat)
        v = _squash(s)
        b = b + jnp.einsum("bljd,bjd->blj", u_hat, v)
    return v  # (B, J, D)


def caps_mha_layer(p, c_encode, query_encode, num_caps, num_routing):
    B, L, H = c_encode.shape
    u_c, u_sfu = pallas_caps_proj(
        c_encode.reshape(B * L, H), query_encode.reshape(B * L, H),
        p["sfu"], p["cap_W"], p["cap_sfu_W"])
    c_cap = dynamic_routing(u_c.reshape(B, L, num_caps, H), num_routing)
    sfu_cap = dynamic_routing(u_sfu.reshape(B, L, num_caps, H), num_routing)
    return pallas_caps_attn(query_encode, c_cap, sfu_cap)


def transformer_block(p, c_encode, c2w_encode, c2f_encode, cfg, compute_att):
    J, R = cfg["num_caps"], cfg["num_routing"]
    caps_e2w = caps_mha_layer(p["e2w_caps"], c_encode, c2w_encode, J, R)
    caps_e2f = caps_mha_layer(p["e2f_caps"], c_encode, c2f_encode, J, R)
    concat = jnp.concatenate([caps_e2w, caps_e2f], axis=2)          # (B, L, 2H)
    new_enc = pallas_block_tail(concat, c_encode, p["selfatt"], p["ffn"], p["resn"])
    if compute_att:
        w_att = pallas_attn_scores(c2w_encode, p["e2w_att"])
        f_att = pallas_attn_scores(c2f_encode, p["e2f_att"])
    else:
        # Attention maps from non-final blocks are overwritten / discarded in
        # the reference forward -- skip the dead computation entirely.
        w_att = f_att = None
    return new_enc, w_att, f_att


def mwml_forward(params, chars_segs, words_segs, feas_segs, pad_ids, cfg):
    B, L = chars_segs.shape
    chars_embd = (params["chars_emb"][chars_segs]
                  + params["pad_emb"][pad_ids]
                  + params["pos_emb"][jnp.arange(L)][None, :, :])
    # dropout disabled (eval mode)
    words_mask = params["bmes_emb"][words_segs]
    feas_mask = params["feat_emb"][feas_segs]

    c2w_encode = pallas_encoder(chars_embd + words_mask, params["c2w_enc"])
    c2f_encode = pallas_encoder(chars_embd + feas_mask, params["c2f_enc"])
    c_encode = pallas_encoder(chars_embd, params["c_enc"])

    w_att = f_att = None
    nblocks = cfg["block_layers"]
    for idx in range(nblocks):
        compute_att = (idx == nblocks - 1)
        out, wa, fa = transformer_block(params["blocks"][idx], c_encode,
                                        c2w_encode, c2f_encode, cfg, compute_att)
        if compute_att:
            w_att, f_att = wa, fa
        if idx % 2 == 0:
            c2w_encode = out
        else:
            c2f_encode = out
    # output block: its attention maps are discarded in the reference forward
    c_encode, _, _ = transformer_block(params["out_block"], c_encode,
                                       c2w_encode, c2f_encode, cfg, False)
    return c_encode, w_att, f_att


# ----------------------------------------------------------------------------
# Deterministic parameter initialization (synthetic, not a checkpoint load)
# ----------------------------------------------------------------------------
def init_linear(key, in_dim, out_dim):
    kw, kb = jax.random.split(key)
    s = 1.0 / (in_dim ** 0.5)
    return {"w": jax.random.uniform(kw, (in_dim, out_dim), jnp.float32, -s, s),
            "b": jax.random.uniform(kb, (1, out_dim), jnp.float32, -s, s)}


def init_caps_mha(key, H, J):
    k = jax.random.split(key, 4)
    s = 1.0 / (H ** 0.5)
    return {
        "cap_W": s * jax.random.normal(k[0], (H, J * H), jnp.float32),
        "cap_sfu_W": s * jax.random.normal(k[1], (H, J * H), jnp.float32),
        "sfu": {"r": init_linear(k[2], 2 * H, H), "g": init_linear(k[3], 2 * H, H)},
    }


def init_block(key, H, J):
    k = jax.random.split(key, 6)
    return {
        "e2w_caps": init_caps_mha(k[0], H, J),
        "e2f_caps": init_caps_mha(k[1], H, J),
        "selfatt": init_linear(k[2], 2 * H, 2 * H),
        "ffn": init_linear(k[3], 2 * H, H),
        "resn": {"gamma": jnp.ones((1, H), jnp.float32),
                 "beta": jnp.zeros((1, H), jnp.float32)},
        "e2w_att": init_linear(k[4], H, H),
        "e2f_att": init_linear(k[5], H, H),
    }


def init_encoder(key, layer_num, in_dim, out_dim):
    ks = jax.random.split(key, layer_num)
    layers, d = [], in_dim
    for i in range(layer_num):
        layers.append(init_linear(ks[i], d, out_dim))
        d = out_dim
    return layers


def init_params(key, cfg):
    E, H, J = cfg["embedding_dim"], cfg["hidden_dim"], cfg["num_caps"]
    n = 9 + cfg["block_layers"]
    ks = jax.random.split(key, n)
    return {
        "chars_emb": 0.02 * jax.random.normal(ks[0], (cfg["vocab_size"], E), jnp.float32),
        "pos_emb": 0.02 * jax.random.normal(ks[1], (cfg["pos_size"], E), jnp.float32),
        "pad_emb": 0.02 * jax.random.normal(ks[2], (3, E), jnp.float32),
        "bmes_emb": 0.02 * jax.random.normal(ks[3], (4, E), jnp.float32),
        "feat_emb": 0.02 * jax.random.normal(ks[4], (cfg["features_size"], E), jnp.float32),
        "c2w_enc": init_encoder(ks[5], cfg["layer_num"], E, H),
        "c2f_enc": init_encoder(ks[6], cfg["layer_num"], E, H),
        "c_enc": init_encoder(ks[7], cfg["layer_num"], E, H),
        "blocks": [init_block(ks[8 + i], H, J) for i in range(cfg["block_layers"])],
        "out_block": init_block(ks[8 + cfg["block_layers"]], H, J),
    }


# ----------------------------------------------------------------------------
if __name__ == "__main__":
    cfg = dict(
        vocab_size=50, features_size=7, embedding_dim=64, hidden_dim=32,
        pos_size=16, num_caps=4, num_routing=3, block_layers=2, layer_num=2,
    )
    key = jax.random.PRNGKey(0)
    kp, k1, k2, k3, k4 = jax.random.split(key, 5)
    params = init_params(kp, cfg)

    B, L = 2, 8
    chars_segs = jax.random.randint(k1, (B, L), 0, cfg["vocab_size"], dtype=jnp.int32)
    words_segs = jax.random.randint(k2, (B, L), 0, 4, dtype=jnp.int32)
    feas_segs = jax.random.randint(k3, (B, L), 0, cfg["features_size"], dtype=jnp.int32)
    pad_ids = jax.random.randint(k4, (B, L), 0, 3, dtype=jnp.int32)

    c_encode, w_att, f_att = mwml_forward(params, chars_segs, words_segs,
                                          feas_segs, pad_ids, cfg)
    jax.block_until_ready((c_encode, w_att, f_att))

    assert c_encode.shape == (B, L, cfg["hidden_dim"])
    assert w_att.shape == (B, L, L)
    assert f_att.shape == (B, L, L)
    assert jnp.all(jnp.isfinite(c_encode))
    assert jnp.all(jnp.isfinite(w_att)) and jnp.all(jnp.isfinite(f_att))
    print("KERNEL_OK")
</pallas_src>

<mosaic_0001>
module attributes {stable_mosaic.version = 11 : i64} {
  func.func @_encoder_kernel(%arg0: i32, %arg1: memref<16x64xbf16, #tpu.memory_space<vmem>>, %arg2: memref<64x32xbf16, #tpu.memory_space<vmem>>, %arg3: memref<1x32xf32, #tpu.memory_space<vmem>>, %arg4: memref<32x32xbf16, #tpu.memory_space<vmem>>, %arg5: memref<1x32xf32, #tpu.memory_space<vmem>>, %arg6: memref<16x32xf32, #tpu.memory_space<vmem>>) attributes {dimension_semantics = [#tpu.dimension_semantics<parallel>], iteration_bounds = array<i64: 1>, scalar_prefetch = 0 : i64, scratch_operands = 0 : i64, tpu.core_type = #tpu.core_type<tc>, window_params = [{transform_indices = @transform_0, window_bounds = array<i64: 16, 64>}, {pipeline_mode = #tpu.pipeline_mode<synchronous>, transform_indices = @transform_1, window_bounds = array<i64: 64, 32>}, {pipeline_mode = #tpu.pipeline_mode<synchronous>, transform_indices = @transform_2, window_bounds = array<i64: 1, 32>}, {pipeline_mode = #tpu.pipeline_mode<synchronous>, transform_indices = @transform_3, window_bounds = array<i64: 32, 32>}, {pipeline_mode = #tpu.pipeline_mode<synchronous>, transform_indices = @transform_4, window_bounds = array<i64: 1, 32>}, {transform_indices = @transform_5, window_bounds = array<i64: 16, 32>}]} {
    %c0 = arith.constant 0 : index
    %c0_0 = arith.constant 0 : index
    %0 = vector.load %arg1[%c0, %c0_0] : memref<16x64xbf16, #tpu.memory_space<vmem>>, vector<16x64xbf16>
    %c0_1 = arith.constant 0 : index
    %c0_2 = arith.constant 0 : index
    %1 = vector.load %arg2[%c0_1, %c0_2] : memref<64x32xbf16, #tpu.memory_space<vmem>>, vector<64x32xbf16>
    %c0_3 = arith.constant 0 : index
    %c0_4 = arith.constant 0 : index
    %2 = vector.load %arg3[%c0_3, %c0_4] : memref<1x32xf32, #tpu.memory_space<vmem>>, vector<1x32xf32>
    %cst = arith.constant dense<0.000000e+00> : vector<16x32xf32>
    %3 = tpu.matmul %0, %1, %cst {dimension_numbers = #tpu.dot_dimension_numbers<[1], [0], [0], [1], [0, 0, 1, 1], [], []>} : vector<16x64xbf16>, vector<64x32xbf16>, vector<16x32xf32> -> vector<16x32xf32>
    %4 = vector.broadcast %2 : vector<1x32xf32> to vector<16x32xf32>
    %5 = arith.addf %3, %4 : vector<16x32xf32>
    %cst_5 = arith.constant 5.000000e-01 : f32
    %6 = vector.broadcast %cst_5 : f32 to vector<16x32xf32>
    %7 = arith.mulf %6, %5 : vector<16x32xf32>
    %cst_6 = arith.constant 4.471500e-02 : f32
    %8 = vector.broadcast %cst_6 : f32 to vector<16x32xf32>
    %9 = arith.mulf %8, %5 : vector<16x32xf32>
    %10 = arith.mulf %9, %5 : vector<16x32xf32>
    %11 = arith.mulf %10, %5 : vector<16x32xf32>
    %12 = arith.addf %5, %11 : vector<16x32xf32>
    %cst_7 = arith.constant 0.797884583 : f32
    %13 = vector.broadcast %cst_7 : f32 to vector<16x32xf32>
    %14 = arith.mulf %13, %12 : vector<16x32xf32>
    %15 = math.tanh %14 : vector<16x32xf32>
    %cst_8 = arith.constant 1.000000e+00 : f32
    %16 = vector.broadcast %cst_8 : f32 to vector<16x32xf32>
    %17 = arith.addf %16, %15 : vector<16x32xf32>
    %18 = arith.mulf %7, %17 : vector<16x32xf32>
    %c0_9 = arith.constant 0 : index
    %c0_10 = arith.constant 0 : index
    %19 = vector.load %arg4[%c0_9, %c0_10] : memref<32x32xbf16, #tpu.memory_space<vmem>>, vector<32x32xbf16>
    %c0_11 = arith.constant 0 : index
    %c0_12 = arith.constant 0 : index
    %20 = vector.load %arg5[%c0_11, %c0_12] : memref<1x32xf32, #tpu.memory_space<vmem>>, vector<1x32xf32>
    %21 = arith.truncf %18 : vector<16x32xf32> to vector<16x32xbf16>
    %cst_13 = arith.constant dense<0.000000e+00> : vector<16x32xf32>
    %22 = tpu.matmul %21, %19, %cst_13 {dimension_numbers = #tpu.dot_dimension_numbers<[1], [0], [0], [1], [0, 0, 1, 1], [], []>} : vector<16x32xbf16>, vector<32x32xbf16>, vector<16x32xf32> -> vector<16x32xf32>
    %23 = vector.broadcast %20 : vector<1x32xf32> to vector<16x32xf32>
    %24 = arith.addf %22, %23 : vector<16x32xf32>
    %cst_14 = arith.constant 5.000000e-01 : f32
    %25 = vector.broadcast %cst_14 : f32 to vector<16x32xf32>
    %26 = arith.mulf %25, %24 : vector<16x32xf32>
    %cst_15 = arith.constant 4.471500e-02 : f32
    %27 = vector.broadcast %cst_15 : f32 to vector<16x32xf32>
    %28 = arith.mulf %27, %24 : vector<16x32xf32>
    %29 = arith.mulf %28, %24 : vector<16x32xf32>
    %30 = arith.mulf %29, %24 : vector<16x32xf32>
    %31 = arith.addf %24, %30 : vector<16x32xf32>
    %cst_16 = arith.constant 0.797884583 : f32
    %32 = vector.broadcast %cst_16 : f32 to vector<16x32xf32>
    %33 = arith.mulf %32, %31 : vector<16x32xf32>
    %34 = math.tanh %33 : vector<16x32xf32>
    %cst_17 = arith.constant 1.000000e+00 : f32
    %35 = vector.broadcast %cst_17 : f32 to vector<16x32xf32>
    %36 = arith.addf %35, %34 : vector<16x32xf32>
    %37 = arith.mulf %26, %36 : vector<16x32xf32>
    %c0_18 = arith.constant 0 : index
    %c0_19 = arith.constant 0 : index
    %38 = vector.load %arg6[%c0_18, %c0_19] : memref<16x32xf32, #tpu.memory_space<vmem>>, vector<16x32xf32>
    tpu.vector_store %arg6[%c0_18, %c0_19], %37 {strides = array<i32>} : memref<16x32xf32, #tpu.memory_space<vmem>>, vector<16x32xf32>,
    return
  }
  func.func @transform_0(%arg0: i32) -> (i32, i32) {
    %c0_i32 = arith.constant 0 : i32
    %c0_i32_0 = arith.constant 0 : i32
    return %arg0, %c0_i32 : i32, i32
  }
  func.func @transform_1(%arg0: i32) -> (i32, i32) {
    %c0_i32 = arith.constant 0 : i32
    %c0_i32_0 = arith.constant 0 : i32
    %c0_i32_1 = arith.constant 0 : i32
    return %c0_i32, %c0_i32_0 : i32, i32
  }
  func.func @transform_2(%arg0: i32) -> (i32, i32) {
    %c0_i32 = arith.constant 0 : i32
    %c0_i32_0 = arith.constant 0 : i32
    %c0_i32_1 = arith.constant 0 : i32
    return %c0_i32, %c0_i32_0 : i32, i32
  }
  func.func @transform_3(%arg0: i32) -> (i32, i32) {
    %c0_i32 = arith.constant 0 : i32
    %c0_i32_0 = arith.constant 0 : i32
    %c0_i32_1 = arith.constant 0 : i32
    return %c0_i32, %c0_i32_0 : i32, i32
  }
  func.func @transform_4(%arg0: i32) -> (i32, i32) {
    %c0_i32 = arith.constant 0 : i32
    %c0_i32_0 = arith.constant 0 : i32
    %c0_i32_1 = arith.constant 0 : i32
    return %c0_i32, %c0_i32_0 : i32, i32
  }
  func.func @transform_5(%arg0: i32) -> (i32, i32) {
    %c0_i32 = arith.constant 0 : i32
    %c0_i32_0 = arith.constant 0 : i32
    return %arg0, %c0_i32 : i32, i32
  }
}

</mosaic_0001>

<llo_original>
// kernel: tpu_custom_call.1
$region0: #{tpu_custom_call.1}
  #allocation0 [shape = 'u32[]', space=smem, size = 0x4, offset = 0x4, fixed_abs, tag = 'smem constant byte address 0x4 - core index']
  #allocation1 [shape = 'u32[144,128]{1,0:T(1,128)}', space=vmem, size = 0x12000, scoped, tag = 'internal scratch']
  %s0 = inlined_call_operand.vmem [shape: bf16[16,64], index: 0, kind: input, shape index: {}]
  %s1 = inlined_call_operand.vmem [shape: bf16[64,32], index: 1, kind: input, shape index: {}]
  %s2 = inlined_call_operand.vmem [shape: f32[1,32], index: 2, kind: input, shape index: {}]
  %s3 = inlined_call_operand.vmem [shape: bf16[32,32], index: 3, kind: input, shape index: {}]
  %s4 = inlined_call_operand.vmem [shape: f32[1,32], index: 4, kind: input, shape index: {}]
  %s5 = inlined_call_operand.hbm [shape: f32[16,32], index: 5, kind: output, shape index: {}]
  %s6 = sld [smem:[#allocation0]]
  $region30: #{tpu_custom_call.1} parent=0
    _
  %s8 = ssub.s32 1, %s6
  %s9 = scalar_select 0, %s8, %s6
  $region1: #{tpu_custom_call.1} parent=0
    #allocation2 [shape = 'u8[8192]{0}', space=vmem, size = 0x2000, scoped, tag = 'output window, operand 0, single buffered']
    #allocation3 [shape = 's32[1]{0}', space=sflag, size = 0x4, scoped, tag = 'scoped memory for tpu_custom_call.1']
    %10 = vsyncpa [#allocation3], 0
    // Predicated region
    $region2: #{tpu_custom_call.1} parent=1 // pred_check
      _
    $region3: #{tpu_custom_call.1} parent=1 // pred_check_branch
      %12 = sbr.rel (0) target = $region5
    $region4: #{tpu_custom_call.1} parent=1 // pred_region
      _
    $region5: #{tpu_custom_call.1} parent=1 // pred_fallthru
      _
    // Predicated region
    $region6: #{tpu_custom_call.1} parent=1 // pred_check
      _
    $region7: #{tpu_custom_call.1} parent=1 // pred_check_branch
      %14 = sbr.rel (0) target = $region9
    $region8: #{tpu_custom_call.1} parent=1 // pred_region
      _
    $region9: #{tpu_custom_call.1} parent=1 // pred_fallthru
      _
    // Predicated region
    $region10: #{tpu_custom_call.1} parent=1 // pred_check
      _
    $region11: #{tpu_custom_call.1} parent=1 // pred_check_branch
      %16 = sbr.rel (0) target = $region13
    $region12: #{tpu_custom_call.1} parent=1 // pred_region
      _
    $region13: #{tpu_custom_call.1} parent=1 // pred_fallthru
      _
    // Predicated region
    $region14: #{tpu_custom_call.1} parent=1 // pred_check
      _
    $region15: #{tpu_custom_call.1} parent=1 // pred_check_branch
      %18 = sbr.rel (0) target = $region17
    $region16: #{tpu_custom_call.1} parent=1 // pred_region
      _
    $region17: #{tpu_custom_call.1} parent=1 // pred_fallthru
      _
    // Predicated region
    $region18: #{tpu_custom_call.1} parent=1 // pred_check
      _
    $region19: #{tpu_custom_call.1} parent=1 // pred_check_branch
      %20 = sbr.rel (0) target = $region21
    $region20: #{tpu_custom_call.1} parent=1 // pred_region
      _
    $region21: #{tpu_custom_call.1} parent=1 // pred_fallthru
      _
    %v22 = vld [vmem:[%s0] sm:$0xf]
    %v23 = vld [vmem:[%s0 + $0x4] sm:$0xf]
    %v24 = vld [vmem:[%s1] sm:$0xf]
    %v25 = vld [vmem:[%s1 + $0x4] sm:$0xf]
    %v26 = vld [vmem:[%s1 + $0x8] sm:$0xf]
    %v27 = vld [vmem:[%s1 + $0xc] sm:$0xf]
    %v28 = vld [vmem:[%s1 + $0x10] sm:$0xf]
    %v29 = vld [vmem:[%s1 + $0x14] sm:$0xf]
    %v30 = vld [vmem:[%s1 + $0x18] sm:$0xf]
    %v31 = vld [vmem:[%s1 + $0x1c] sm:$0xf]
    %v32 = vld [vmem:[%s2] sm:$0x1]
    %v34 = vlaneseq
    %v35 = vshrl.u32 %v34, 7
    %v36 = vsub.s32 0, %v35
    %v37 = vrot.slane %v32, %v36
    %v41 = vunpack.c.l.b16 %v22
    %v42 = vunpack.c.l.b16 %v23
    %v43 = vpack.c.b16 %v42, %v41
    %v52 = vunpack.c.l.b16 %v24
    %v53 = vunpack.c.l.b16 %v25
    %v54 = vunpack.c.l.b16 %v26
    %v55 = vunpack.c.l.b16 %v27
    %v56 = vunpack.c.l.b16 %v28
    %v57 = vunpack.c.l.b16 %v29
    %v58 = vunpack.c.l.b16 %v30
    %v59 = vunpack.c.l.b16 %v31
    %v60 = vpack.c.b16 %v53, %v52
    %v61 = vpack.c.b16 %v55, %v54
    %v62 = vpack.c.b16 %v57, %v56
    %v63 = vpack.c.b16 %v59, %v58
    %vm68 = vcmask 523264
    %v70 = vsel %vm68, %v43, 0
    %72 = vmatprep.subr.bf16.mxu0 0
    %73 = vmatpush1.bf16.msra.mxu0 0
    %74 = vmatprep.subr.bf16.mxu0 0
    %75 = vmatpush1.bf16.msra.mxu0 0
    %76 = vmatprep.subr.bf16.mxu0 0
    %77 = vmatpush1.bf16.msra.mxu0 0
    %78 = vmatprep.subr.bf16.mxu0 0
    %79 = vmatpush1.bf16.msra.mxu0 0
    %80 = vmatprep.subr.bf16.mxu0 0
    %81 = vmatpush1.bf16.msra.mxu0 %v63
    %82 = vmatprep.subr.bf16.mxu0 0
    %83 = vmatpush1.bf16.msra.mxu0 %v62
    %84 = vmatprep.subr.bf16.mxu0 0
    %85 = vmatpush1.bf16.msra.mxu0 %v61
    %86 = vmatprep.subr.bf16.mxu0 0
    %87 = vmatpush1.bf16.msra.mxu0 %v60
    %88 = vmatprep.subr.bf16.mxu0 0
    %89 = vmatpush2.bf16.msra.mxu0 0
    %90 = vmatprep.subr.bf16.mxu0 0
    %91 = vmatpush2.bf16.msra.mxu0 0
    %92 = vmatprep.subr.bf16.mxu0 0
    %93 = vmatpush2.bf16.msra.mxu0 0
    %94 = vmatprep.subr.bf16.mxu0 0
    %95 = vmatpush2.bf16.msra.mxu0 0
    %96 = vmatprep.subr.bf16.mxu0 0
    %97 = vmatpush2.bf16.msra.mxu0 0
    %98 = vmatprep.subr.bf16.mxu0 0
    %99 = vmatpush2.bf16.msra.mxu0 0
    %100 = vmatprep.subr.bf16.mxu0 0
    %101 = vmatpush2.bf16.msra.mxu0 0
    %102 = vmatprep.subr.bf16.mxu0 0
    %103 = vmatpush2.bf16.msra.mxu0 0
    %104 = vmatprep.mubr.bf16.mxu0 0
    %105 = vmatmul.mubr.bf16.gmra.mxu0 %v70
    %v106 = vpop.f32.mrf.mxu0
    %v107 = vadd.f32 %v37, %v106
    %v108 = vpop.f32.mrf.mxu0
    %v109 = vpop.f32.mrf.mxu0
    %v110 = vadd.f32 %v37, %v109
    %v111 = vpop.f32.mrf.mxu0
    %112 = vdwg.mxu0
    %v113 = vmul.f32 %v107, 0.5
    %v114 = vmul.f32 %v110, 0.5
    %v115 = vmul.f32 %v107, 0.044715
    %v116 = vmul.f32 %v110, 0.044715
    %v117 = vmul.f32 %v115, %v107
    %v118 = vmul.f32 %v116, %v110
    %v119 = vmul.f32 %v117, %v107
    %v120 = vmul.f32 %v118, %v110
    %v121 = vadd.f32 %v107, %v119
    %v122 = vadd.f32 %v110, %v120
    %v123 = vmul.f32 %v121, 0.7978846
    %v124 = vmul.f32 %v122, 0.7978846
    %v125 = vtanh.pop %v123
    %v126 = vtanh.pop %v124
    %v127 = vadd.f32 %v125, 1.0
    %v128 = vadd.f32 %v126, 1.0
    %v129 = vmul.f32 %v113, %v127
    %v130 = vmul.f32 %v114, %v128
    %v131 = vld [vmem:[%s3] sm:$0xf]
    %v132 = vld [vmem:[%s3 + $0x4] sm:$0xf]
    %v133 = vld [vmem:[%s3 + $0x8] sm:$0xf]
    %v134 = vld [vmem:[%s3 + $0xc] sm:$0xf]
    %v135 = vld [vmem:[%s4] sm:$0x1]
    %v136 = vpack.c.bf16 %v130, %v129
    %v138 = vlaneseq
    %v139 = vshrl.u32 %v138, 7
    %v140 = vsub.s32 0, %v139
    %v141 = vrot.slane %v135, %v140
    %v147 = vunpack.c.l.b16 %v131
    %v148 = vunpack.c.l.b16 %v132
    %v149 = vunpack.c.l.b16 %v133
    %v150 = vunpack.c.l.b16 %v134
    %v151 = vpack.c.b16 %v148, %v147
    %v152 = vpack.c.b16 %v150, %v149
    %vm155 = vcmask 261120
    %v157 = vsel %vm155, %v136, 0
    %159 = vmatprep.subr.bf16.mxu0 0
    %160 = vmatpush1.bf16.msra.mxu0 0
    %161 = vmatprep.subr.bf16.mxu0 0
    %162 = vmatpush1.bf16.msra.mxu0 0
    %163 = vmatprep.subr.bf16.mxu0 0
    %164 = vmatpush1.bf16.msra.mxu0 0
    %165 = vmatprep.subr.bf16.mxu0 0
    %166 = vmatpush1.bf16.msra.mxu0 0
    %167 = vmatprep.subr.bf16.mxu0 0
    %168 = vmatpush1.bf16.msra.mxu0 0
    %169 = vmatprep.subr.bf16.mxu0 0
    %170 = vmatpush1.bf16.msra.mxu0 0
    %171 = vmatprep.subr.bf16.mxu0 0
    %172 = vmatpush1.bf16.msra.mxu0 %v152
    %173 = vmatprep.subr.bf16.mxu0 0
    %174 = vmatpush1.bf16.msra.mxu0 %v151
    %175 = vmatprep.subr.bf16.mxu0 0
    %176 = vmatpush2.bf16.msra.mxu0 0
    %177 = vmatprep.subr.bf16.mxu0 0
    %178 = vmatpush2.bf16.msra.mxu0 0
    %179 = vmatprep.subr.bf16.mxu0 0
    %180 = vmatpush2.bf16.msra.mxu0 0
    %181 = vmatprep.subr.bf16.mxu0 0
    %182 = vmatpush2.bf16.msra.mxu0 0
    %183 = vmatprep.subr.bf16.mxu0 0
    %184 = vmatpush2.bf16.msra.mxu0 0
    %185 = vmatprep.subr.bf16.mxu0 0
    %186 = vmatpush2.bf16.msra.mxu0 0
    %187 = vmatprep.subr.bf16.mxu0 0
    %188 = vmatpush2.bf16.msra.mxu0 0
    %189 = vmatprep.subr.bf16.mxu0 0
    %190 = vmatpush2.bf16.msra.mxu0 0
    %191 = vmatprep.mubr.bf16.mxu0 0
    %192 = vmatmul.mubr.bf16.gmra.mxu0 %v157
    %v193 = vpop.f32.mrf.mxu0
    %v194 = vadd.f32 %v141, %v193
    %v195 = vpop.f32.mrf.mxu0
    %v196 = vpop.f32.mrf.mxu0
    %v197 = vadd.f32 %v141, %v196
    %v198 = vpop.f32.mrf.mxu0
    %199 = vdwg.mxu0
    %v200 = vmul.f32 %v194, 0.5
    %v201 = vmul.f32 %v197, 0.5
    %v202 = vmul.f32 %v194, 0.044715
    %v203 = vmul.f32 %v197, 0.044715
    %v204 = vmul.f32 %v202, %v194
    %v205 = vmul.f32 %v203, %v197
    %v206 = vmul.f32 %v204, %v194
    %v207 = vmul.f32 %v205, %v197
    %v208 = vadd.f32 %v194, %v206
    %v209 = vadd.f32 %v197, %v207
    %v210 = vmul.f32 %v208, 0.7978846
    %v211 = vmul.f32 %v209, 0.7978846
    %v212 = vtanh.pop %v210
    %v213 = vtanh.pop %v211
    %v214 = vadd.f32 %v212, 1.0
    %v215 = vadd.f32 %v213, 1.0
    %v216 = vmul.f32 %v200, %v214
    %v217 = vmul.f32 %v201, %v215
    %218 = vst.msk [vmem:[#allocation2] sm:$0xff] %vm155, %v216
    %219 = vst.msk [vmem:[#allocation2 + $0x8] sm:$0xff] %vm155, %v217
    // Predicated region
    $region22: #{tpu_custom_call.1} parent=1 // pred_check
      _
    $region23: #{tpu_custom_call.1} parent=1 // pred_check_branch
      %221 = sbr.rel (0) target = $region25
    $region24: #{tpu_custom_call.1} parent=1 // pred_region
      %s223 = ssub.s32 256, 256
      %224 = vsyncadd [#allocation3], %s223
      %s225 = sshll.u32 [#allocation2], 4
      %s226 = int_to_ptr.vmem [resolvable:$true] %s225
      %231 = dma.vmem_to_hbm [thread:$0]  %s226, 256, %s5, [#allocation3], 128, 128, 8
    $region25: #{tpu_custom_call.1} parent=1 // pred_fallthru
      _
    // Predicated region
    $region26: #{tpu_custom_call.1} parent=1 // pred_check
      _
    $region27: #{tpu_custom_call.1} parent=1 // pred_check_branch
      %233 = sbr.rel (0) target = $region29
    $region28: #{tpu_custom_call.1} parent=1 // pred_region
      %234 = dma.done [#allocation3], 256
    $region29: #{tpu_custom_call.1} parent=1 // pred_fallthru
      _
    %235 = vsyncpa [#allocation3], 1

</llo_original>
